<compile_context>
chip_gen: v5e
topology: v5e:2x2
jax: 0.10.0
libtpu: 0.0.40
codegen_flags: <defaults>
</compile_context>

<pallas_src>
import functools
import math

import jax
import jax.numpy as jnp
from jax import lax
from jax.experimental import pallas as pl
from jax.experimental.pallas import tpu as pltpu

_VMEM_LIMIT = 32 * 1024 * 1024  # explicit scoped-VMEM limit, safe on v5e/v6e/v7x


# ---------------------------------------------------------------------------
# Shared in-kernel attention body (traced inside both kernels).
#   q  : (Sq, H) f32, already scaled by 1/sqrt(Dh)
#   k,v: (Sk, H) f32
#   wo : (H, H)  output-projection weight (resident block)
#   vl : scalar int32 valid length (key positions >= vl masked to -1e6)
# Returns the final (Sq, H) f32 output tile (attention + W_o fused).
# ---------------------------------------------------------------------------
def _attend_and_project(q, k, v, wo, vl, num_heads, use_bf16):
    sq, h = q.shape
    sk = k.shape[0]
    dh = h // num_heads

    def mxu(a):
        return a.astype(jnp.bfloat16) if use_bf16 else a

    # Mask hoisted out of the per-head loop: key positions >= valid_len.
    col = lax.broadcasted_iota(jnp.int32, (sq, sk), 1)
    mask = col < vl
    neg = jnp.float32(-1000000.0)

    acc = jnp.zeros((sq, h), jnp.float32)
    for hd in range(num_heads):
        lo = hd * dh
        qh = q[:, lo:lo + dh]                       # (Sq, Dh) lane slice
        kh = k[:, lo:lo + dh]                       # (Sk, Dh)
        vh = v[:, lo:lo + dh]                       # (Sk, Dh)

        # scores (Sq, Sk) on the MXU without an explicit k transpose.
        s = lax.dot_general(mxu(qh), mxu(kh), (((1,), (1,)), ((), ())),
                            preferred_element_type=jnp.float32)
        s = jnp.where(mask, s, neg)

        # masked softmax along keys, all math in f32; 1/sum goes to the EUP.
        m = jnp.max(s, axis=-1, keepdims=True)
        e = jnp.exp(s - m)
        p = e * pl.reciprocal(jnp.sum(e, axis=-1, keepdims=True), approx=True)

        # ctx (Sq, Dh); dropout is identity in eval mode.
        ctx = jnp.dot(mxu(p), mxu(vh), preferred_element_type=jnp.float32)

        # Fused output projection:  acc += ctx @ W_o[h*Dh:(h+1)*Dh, :]
        acc = acc + jnp.dot(mxu(ctx), mxu(wo[lo:lo + dh, :]),
                            preferred_element_type=jnp.float32)
    return acc


# ---------------------------------------------------------------------------
# Kernel A: self-attention (queries is keys is values).
# One grid step = one batch element; single wide (Dq, 3H) QKV projection.
# ---------------------------------------------------------------------------
def _mha_self_kernel(vl_ref, x_ref, wqkv_ref, wo_ref, o_ref, *,
                     num_heads, use_bf16):
    b = pl.program_id(0)
    h = o_ref.shape[2]
    dh = h // num_heads
    scale = jnp.float32(1.0 / math.sqrt(dh))

    def mxu(a):
        return a.astype(jnp.bfloat16) if use_bf16 else a

    x = x_ref[0]                                            # (S, D_in)
    qkv = jnp.dot(mxu(x), mxu(wqkv_ref[...]),
                  preferred_element_type=jnp.float32)       # (S, 3H)
    q = qkv[:, :h] * scale
    k = qkv[:, h:2 * h]
    v = qkv[:, 2 * h:]

    acc = _attend_and_project(q, k, v, wo_ref[...], vl_ref[b],
                              num_heads, use_bf16)
    o_ref[0] = acc.astype(o_ref.dtype)


# ---------------------------------------------------------------------------
# Kernel B: general (cross-) attention with separate Q/K/V projections.
# ---------------------------------------------------------------------------
def _mha_cross_kernel(vl_ref, xq_ref, xk_ref, xv_ref,
                      wq_ref, wk_ref, wv_ref, wo_ref, o_ref, *,
                      num_heads, use_bf16):
    b = pl.program_id(0)
    h = o_ref.shape[2]
    dh = h // num_heads
    scale = jnp.float32(1.0 / math.sqrt(dh))

    def mxu(a):
        return a.astype(jnp.bfloat16) if use_bf16 else a

    q = jnp.dot(mxu(xq_ref[0]), mxu(wq_ref[...]),
                preferred_element_type=jnp.float32) * scale  # (Sq, H)
    k = jnp.dot(mxu(xk_ref[0]), mxu(wk_ref[...]),
                preferred_element_type=jnp.float32)          # (Sk, H)
    v = jnp.dot(mxu(xv_ref[0]), mxu(wv_ref[...]),
                preferred_element_type=jnp.float32)          # (Sk, H)

    acc = _attend_and_project(q, k, v, wo_ref[...], vl_ref[b],
                              num_heads, use_bf16)
    o_ref[0] = acc.astype(o_ref.dtype)


# ---------------------------------------------------------------------------
# Wrapper: full MultiHeadAttention forward as one pallas_call.
# ---------------------------------------------------------------------------
def multi_head_attention(queries, keys, values, valid_lens, params, num_heads,
                         use_bf16=False):
    B, Sq, Dq = queries.shape
    _, Sk, Dk = keys.shape
    _, _, Dv = values.shape
    H = params["w_q"].shape[1]
    assert H % num_heads == 0

    if valid_lens is None:
        vl = jnp.full((B,), Sk, dtype=jnp.int32)   # no masking == full length
    else:
        vl = valid_lens.astype(jnp.int32)          # (B,), no per-head repeat

    out_shape = jax.ShapeDtypeStruct((B, Sq, H), queries.dtype)
    cparams = pltpu.CompilerParams(
        dimension_semantics=("parallel",),         # batch steps shard across TCs
        vmem_limit_bytes=_VMEM_LIMIT,
    )

    if (queries is keys) and (keys is values):
        # Self-attention: concatenate W_q|W_k|W_v -> one wide matmul in-kernel,
        # and DMA the shared input tensor only once per grid step.
        w_qkv = jnp.concatenate(
            [params["w_q"], params["w_k"], params["w_v"]], axis=1)   # (Dq, 3H)
        kernel = functools.partial(_mha_self_kernel,
                                   num_heads=num_heads, use_bf16=use_bf16)
        cost = pl.CostEstimate(
            flops=(2 * B * Sq * Dq * 3 * H + 4 * B * Sq * Sk * H
                   + 2 * B * Sq * H * H),
            transcendentals=B * num_heads * Sq * Sk,
            bytes_accessed=4 * (B * Sq * Dq + Dq * 3 * H + H * H + B * Sq * H),
        )
        return pl.pallas_call(
            kernel,
            out_shape=out_shape,
            grid_spec=pltpu.PrefetchScalarGridSpec(
                num_scalar_prefetch=1,
                grid=(B,),
                in_specs=[
                    pl.BlockSpec((1, Sq, Dq), lambda b, vl: (b, 0, 0)),
                    pl.BlockSpec((Dq, 3 * H), lambda b, vl: (0, 0)),
                    pl.BlockSpec((H, H), lambda b, vl: (0, 0)),
                ],
                out_specs=pl.BlockSpec((1, Sq, H), lambda b, vl: (b, 0, 0)),
            ),
            compiler_params=cparams,
            cost_estimate=cost,
        )(vl, queries, w_qkv, params["w_o"])

    # General / cross-attention path.
    kernel = functools.partial(_mha_cross_kernel,
                               num_heads=num_heads, use_bf16=use_bf16)
    cost = pl.CostEstimate(
        flops=(2 * B * Sq * Dq * H + 2 * B * Sk * (Dk + Dv) * H
               + 4 * B * Sq * Sk * H + 2 * B * Sq * H * H),
        transcendentals=B * num_heads * Sq * Sk,
        bytes_accessed=4 * (B * (Sq * Dq + Sk * Dk + Sk * Dv)
                            + (Dq + Dk + Dv) * H + H * H + B * Sq * H),
    )
    return pl.pallas_call(
        kernel,
        out_shape=out_shape,
        grid_spec=pltpu.PrefetchScalarGridSpec(
            num_scalar_prefetch=1,
            grid=(B,),
            in_specs=[
                pl.BlockSpec((1, Sq, Dq), lambda b, vl: (b, 0, 0)),
                pl.BlockSpec((1, Sk, Dk), lambda b, vl: (b, 0, 0)),
                pl.BlockSpec((1, Sk, Dv), lambda b, vl: (b, 0, 0)),
                pl.BlockSpec((Dq, H), lambda b, vl: (0, 0)),
                pl.BlockSpec((Dk, H), lambda b, vl: (0, 0)),
                pl.BlockSpec((Dv, H), lambda b, vl: (0, 0)),
                pl.BlockSpec((H, H), lambda b, vl: (0, 0)),
            ],
            out_specs=pl.BlockSpec((1, Sq, H), lambda b, vl: (b, 0, 0)),
        ),
        compiler_params=cparams,
        cost_estimate=cost,
    )(vl, queries, keys, values,
      params["w_q"], params["w_k"], params["w_v"], params["w_o"])


# ---------------------------------------------------------------------------
# Pure-JAX reference (correctness check only)
# ---------------------------------------------------------------------------
def transpose_qkv(x, num_heads):
    B, S, H = x.shape
    x = x.reshape(B, S, num_heads, H // num_heads)
    x = jnp.transpose(x, (0, 2, 1, 3))
    return x.reshape(B * num_heads, S, H // num_heads)


def transpose_output(x, num_heads):
    BH, S, Dh = x.shape
    x = x.reshape(BH // num_heads, num_heads, S, Dh)
    x = jnp.transpose(x, (0, 2, 1, 3))
    return x.reshape(BH // num_heads, S, num_heads * Dh)


def reference_mha(queries, keys, values, valid_lens, params, num_heads):
    q = transpose_qkv(queries @ params["w_q"], num_heads)
    k = transpose_qkv(keys @ params["w_k"], num_heads)
    v = transpose_qkv(values @ params["w_v"], num_heads)
    d = q.shape[-1]
    scores = jnp.einsum("bqd,bkd->bqk", q, k) / math.sqrt(d)
    if valid_lens is not None:
        vl = jnp.repeat(valid_lens, num_heads, axis=0)
        col = jnp.arange(scores.shape[-1])[None, None, :]
        scores = jnp.where(col < vl[:, None, None], scores, -1000000.0)
    p = jax.nn.softmax(scores, axis=-1)
    out = jnp.einsum("bqk,bkd->bqd", p, v)
    return transpose_output(out, num_heads) @ params["w_o"]


# ---------------------------------------------------------------------------
if __name__ == "__main__":
    batch = 2
    seq = 8
    query_size = key_size = value_size = 16
    num_hiddens = 32
    num_heads = 4

    root = jax.random.PRNGKey(0)
    k_x, k_q, k_k, k_v, k_wq, k_wk, k_wv, k_wo = jax.random.split(root, 8)

    x = jax.random.normal(k_x, (batch, seq, query_size), jnp.float32)
    queries_c = jax.random.normal(k_q, (batch, seq, query_size), jnp.float32)
    keys_c = jax.random.normal(k_k, (batch, seq, key_size), jnp.float32)
    values_c = jax.random.normal(k_v, (batch, seq, value_size), jnp.float32)
    valid_lens = jnp.array([6, 3], dtype=jnp.int32)

    def init_w(key, fan_in, fan_out):
        bound = 1.0 / math.sqrt(fan_in)
        # stored as (in, out) == W.T of the PyTorch (out, in) weight
        return jax.random.uniform(key, (fan_in, fan_out), jnp.float32, -bound, bound)

    params = {
        "w_q": init_w(k_wq, query_size, num_hiddens),
        "w_k": init_w(k_wk, key_size, num_hiddens),
        "w_v": init_w(k_wv, value_size, num_hiddens),
        "w_o": init_w(k_wo, num_hiddens, num_hiddens),
    }

    # 1) self-attention: fused QKV projection path, f32 MXU operands
    out = multi_head_attention(x, x, x, valid_lens, params, num_heads)
    out = jax.block_until_ready(out)
    ref = reference_mha(x, x, x, valid_lens, params, num_heads)
    assert out.shape == (batch, seq, num_hiddens)
    assert jnp.allclose(out, ref, atol=2e-2, rtol=2e-2), "self-attn f32 mismatch"

    # 2) same inputs, bf16 MXU operands (v6e/v7x fast path), f32 accumulation
    out_bf16 = multi_head_attention(x, x, x, valid_lens, params, num_heads,
                                    use_bf16=True)
    out_bf16 = jax.block_until_ready(out_bf16)
    assert jnp.allclose(out_bf16, ref, atol=5e-2, rtol=5e-2), "self-attn bf16 mismatch"

    # 3) cross-attention: separate-projection path, f32
    out_x = multi_head_attention(queries_c, keys_c, values_c, valid_lens,
                                 params, num_heads)
    out_x = jax.block_until_ready(out_x)
    ref_x = reference_mha(queries_c, keys_c, values_c, valid_lens, params, num_heads)
    assert jnp.allclose(out_x, ref_x, atol=2e-2, rtol=2e-2), "cross-attn f32 mismatch"

    # 4) valid_lens=None (no masking) path
    out_n = multi_head_attention(x, x, x, None, params, num_heads)
    out_n = jax.block_until_ready(out_n)
    ref_n = reference_mha(x, x, x, None, params, num_heads)
    assert jnp.allclose(out_n, ref_n, atol=2e-2, rtol=2e-2), "no-mask f32 mismatch"

    print("KERNEL_OK")
</pallas_src>

<mosaic_0001>
module attributes {stable_mosaic.version = 11 : i64} {
  func.func @_mha_self_kernel(%arg0: i32, %arg1: memref<2xi32, #tpu.memory_space<smem>>, %arg2: memref<1x8x16xf32, #tpu.memory_space<vmem>>, %arg3: memref<16x96xf32, #tpu.memory_space<vmem>>, %arg4: memref<32x32xf32, #tpu.memory_space<vmem>>, %arg5: memref<1x8x32xf32, #tpu.memory_space<vmem>>) attributes {dimension_semantics = [#tpu.dimension_semantics<parallel>], iteration_bounds = array<i64: 2>, scalar_prefetch = 1 : i64, scratch_operands = 0 : i64, tpu.core_type = #tpu.core_type<tc>, window_params = [{transform_indices = @transform_0, window_bounds = array<i64: 1, 8, 16>}, {pipeline_mode = #tpu.pipeline_mode<synchronous>, transform_indices = @transform_1, window_bounds = array<i64: 16, 96>}, {pipeline_mode = #tpu.pipeline_mode<synchronous>, transform_indices = @transform_2, window_bounds = array<i64: 32, 32>}, {transform_indices = @transform_3, window_bounds = array<i64: 1, 8, 32>}]} {
    %c0 = arith.constant 0 : index
    %c0_0 = arith.constant 0 : index
    %c0_1 = arith.constant 0 : index
    %0 = vector.load %arg2[%c0, %c0_0, %c0_1] : memref<1x8x16xf32, #tpu.memory_space<vmem>>, vector<1x8x16xf32>
    %1 = vector.shape_cast %0 : vector<1x8x16xf32> to vector<8x16xf32>
    %c0_2 = arith.constant 0 : index
    %c0_3 = arith.constant 0 : index
    %2 = vector.load %arg3[%c0_2, %c0_3] : memref<16x96xf32, #tpu.memory_space<vmem>>, vector<16x96xf32>
    %cst = arith.constant dense<0.000000e+00> : vector<8x96xf32>
    %3 = tpu.matmul %1, %2, %cst {dimension_numbers = #tpu.dot_dimension_numbers<[1], [0], [0], [1], [0, 0, 1, 1], [], []>} : vector<8x16xf32>, vector<16x96xf32>, vector<8x96xf32> -> vector<8x96xf32>
    %4 = vector.extract_strided_slice %3 {offsets = [0, 0], sizes = [8, 32], strides = [1, 1]} : vector<8x96xf32> to vector<8x32xf32>
    %cst_4 = arith.constant 0.353553385 : f32
    %5 = vector.broadcast %cst_4 : f32 to vector<8x32xf32>
    %6 = arith.mulf %4, %5 : vector<8x32xf32>
    %7 = vector.extract_strided_slice %3 {offsets = [0, 32], sizes = [8, 32], strides = [1, 1]} : vector<8x96xf32> to vector<8x32xf32>
    %8 = vector.extract_strided_slice %3 {offsets = [0, 64], sizes = [8, 32], strides = [1, 1]} : vector<8x96xf32> to vector<8x32xf32>
    %c0_5 = arith.constant 0 : index
    %c0_6 = arith.constant 0 : index
    %9 = vector.load %arg4[%c0_5, %c0_6] : memref<32x32xf32, #tpu.memory_space<vmem>>, vector<32x32xf32>
    %10 = arith.index_cast %arg0 : i32 to index
    %11 = memref.load %arg1[%10] : memref<2xi32, #tpu.memory_space<smem>>
    %12 = tpu.iota {dimensions = array<i32: 1>} : vector<8x8xi32>
    %13 = vector.broadcast %11 : i32 to vector<8x8xi32>
    %14 = arith.cmpi slt, %12, %13 : vector<8x8xi32>
    %cst_7 = arith.constant 0.000000e+00 : f32
    %15 = vector.broadcast %cst_7 : f32 to vector<8x32xf32>
    %16 = vector.extract_strided_slice %6 {offsets = [0, 0], sizes = [8, 8], strides = [1, 1]} : vector<8x32xf32> to vector<8x8xf32>
    %17 = vector.extract_strided_slice %7 {offsets = [0, 0], sizes = [8, 8], strides = [1, 1]} : vector<8x32xf32> to vector<8x8xf32>
    %18 = vector.extract_strided_slice %8 {offsets = [0, 0], sizes = [8, 8], strides = [1, 1]} : vector<8x32xf32> to vector<8x8xf32>
    %cst_8 = arith.constant dense<0.000000e+00> : vector<8x8xf32>
    %19 = tpu.matmul %16, %17, %cst_8 {dimension_numbers = #tpu.dot_dimension_numbers<[1], [1], [0], [0], [0, 0, 1, 0], [], []>} : vector<8x8xf32>, vector<8x8xf32>, vector<8x8xf32> -> vector<8x8xf32>
    %cst_9 = arith.constant -1.000000e+06 : f32
    %20 = vector.broadcast %cst_9 : f32 to vector<8x8xf32>
    %21 = arith.select %14, %19, %20 : vector<8x8xi1>, vector<8x8xf32>
    %cst_10 = arith.constant dense<0xFF800000> : vector<8xf32>
    %22 = vector.multi_reduction <maximumf>, %21, %cst_10 [1] : vector<8x8xf32> to vector<8xf32>
    %23 = vector.shape_cast %22 : vector<8xf32> to vector<8x1xf32>
    %24 = vector.broadcast %23 : vector<8x1xf32> to vector<8x8xf32>
    %25 = arith.subf %21, %24 : vector<8x8xf32>
    %26 = math.exp %25 : vector<8x8xf32>
    %cst_11 = arith.constant dense<0.000000e+00> : vector<8xf32>
    %27 = vector.multi_reduction <add>, %26, %cst_11 [1] : vector<8x8xf32> to vector<8xf32>
    %28 = vector.shape_cast %27 : vector<8xf32> to vector<8x1xf32>
    %29 = tpu.reciprocal %28 {approx = true} : vector<8x1xf32> -> vector<8x1xf32>
    %30 = vector.broadcast %29 : vector<8x1xf32> to vector<8x8xf32>
    %31 = arith.mulf %26, %30 : vector<8x8xf32>
    %cst_12 = arith.constant dense<0.000000e+00> : vector<8x8xf32>
    %32 = tpu.matmul %31, %18, %cst_12 {dimension_numbers = #tpu.dot_dimension_numbers<[1], [0], [0], [1], [0, 0, 1, 1], [], []>} : vector<8x8xf32>, vector<8x8xf32>, vector<8x8xf32> -> vector<8x8xf32>
    %33 = vector.extract_strided_slice %9 {offsets = [0, 0], sizes = [8, 32], strides = [1, 1]} : vector<32x32xf32> to vector<8x32xf32>
    %cst_13 = arith.constant dense<0.000000e+00> : vector<8x32xf32>
    %34 = tpu.matmul %32, %33, %cst_13 {dimension_numbers = #tpu.dot_dimension_numbers<[1], [0], [0], [1], [0, 0, 1, 1], [], []>} : vector<8x8xf32>, vector<8x32xf32>, vector<8x32xf32> -> vector<8x32xf32>
    %35 = arith.addf %15, %34 : vector<8x32xf32>
    %36 = vector.extract_strided_slice %6 {offsets = [0, 8], sizes = [8, 8], strides = [1, 1]} : vector<8x32xf32> to vector<8x8xf32>
    %37 = vector.extract_strided_slice %7 {offsets = [0, 8], sizes = [8, 8], strides = [1, 1]} : vector<8x32xf32> to vector<8x8xf32>
    %38 = vector.extract_strided_slice %8 {offsets = [0, 8], sizes = [8, 8], strides = [1, 1]} : vector<8x32xf32> to vector<8x8xf32>
    %cst_14 = arith.constant dense<0.000000e+00> : vector<8x8xf32>
    %39 = tpu.matmul %36, %37, %cst_14 {dimension_numbers = #tpu.dot_dimension_numbers<[1], [1], [0], [0], [0, 0, 1, 0], [], []>} : vector<8x8xf32>, vector<8x8xf32>, vector<8x8xf32> -> vector<8x8xf32>
    %cst_15 = arith.constant -1.000000e+06 : f32
    %40 = vector.broadcast %cst_15 : f32 to vector<8x8xf32>
    %41 = arith.select %14, %39, %40 : vector<8x8xi1>, vector<8x8xf32>
    %cst_16 = arith.constant dense<0xFF800000> : vector<8xf32>
    %42 = vector.multi_reduction <maximumf>, %41, %cst_16 [1] : vector<8x8xf32> to vector<8xf32>
    %43 = vector.shape_cast %42 : vector<8xf32> to vector<8x1xf32>
    %44 = vector.broadcast %43 : vector<8x1xf32> to vector<8x8xf32>
    %45 = arith.subf %41, %44 : vector<8x8xf32>
    %46 = math.exp %45 : vector<8x8xf32>
    %cst_17 = arith.constant dense<0.000000e+00> : vector<8xf32>
    %47 = vector.multi_reduction <add>, %46, %cst_17 [1] : vector<8x8xf32> to vector<8xf32>
    %48 = vector.shape_cast %47 : vector<8xf32> to vector<8x1xf32>
    %49 = tpu.reciprocal %48 {approx = true} : vector<8x1xf32> -> vector<8x1xf32>
    %50 = vector.broadcast %49 : vector<8x1xf32> to vector<8x8xf32>
    %51 = arith.mulf %46, %50 : vector<8x8xf32>
    %cst_18 = arith.constant dense<0.000000e+00> : vector<8x8xf32>
    %52 = tpu.matmul %51, %38, %cst_18 {dimension_numbers = #tpu.dot_dimension_numbers<[1], [0], [0], [1], [0, 0, 1, 1], [], []>} : vector<8x8xf32>, vector<8x8xf32>, vector<8x8xf32> -> vector<8x8xf32>
    %53 = vector.extract_strided_slice %9 {offsets = [8, 0], sizes = [8, 32], strides = [1, 1]} : vector<32x32xf32> to vector<8x32xf32>
    %cst_19 = arith.constant dense<0.000000e+00> : vector<8x32xf32>
    %54 = tpu.matmul %52, %53, %cst_19 {dimension_numbers = #tpu.dot_dimension_numbers<[1], [0], [0], [1], [0, 0, 1, 1], [], []>} : vector<8x8xf32>, vector<8x32xf32>, vector<8x32xf32> -> vector<8x32xf32>
    %55 = arith.addf %35, %54 : vector<8x32xf32>
    %56 = vector.extract_strided_slice %6 {offsets = [0, 16], sizes = [8, 8], strides = [1, 1]} : vector<8x32xf32> to vector<8x8xf32>
    %57 = vector.extract_strided_slice %7 {offsets = [0, 16], sizes = [8, 8], strides = [1, 1]} : vector<8x32xf32> to vector<8x8xf32>
    %58 = vector.extract_strided_slice %8 {offsets = [0, 16], sizes = [8, 8], strides = [1, 1]} : vector<8x32xf32> to vector<8x8xf32>
    %cst_20 = arith.constant dense<0.000000e+00> : vector<8x8xf32>
    %59 = tpu.matmul %56, %57, %cst_20 {dimension_numbers = #tpu.dot_dimension_numbers<[1], [1], [0], [0], [0, 0, 1, 0], [], []>} : vector<8x8xf32>, vector<8x8xf32>, vector<8x8xf32> -> vector<8x8xf32>
    %cst_21 = arith.constant -1.000000e+06 : f32
    %60 = vector.broadcast %cst_21 : f32 to vector<8x8xf32>
    %61 = arith.select %14, %59, %60 : vector<8x8xi1>, vector<8x8xf32>
    %cst_22 = arith.constant dense<0xFF800000> : vector<8xf32>
    %62 = vector.multi_reduction <maximumf>, %61, %cst_22 [1] : vector<8x8xf32> to vector<8xf32>
    %63 = vector.shape_cast %62 : vector<8xf32> to vector<8x1xf32>
    %64 = vector.broadcast %63 : vector<8x1xf32> to vector<8x8xf32>
    %65 = arith.subf %61, %64 : vector<8x8xf32>
    %66 = math.exp %65 : vector<8x8xf32>
    %cst_23 = arith.constant dense<0.000000e+00> : vector<8xf32>
    %67 = vector.multi_reduction <add>, %66, %cst_23 [1] : vector<8x8xf32> to vector<8xf32>
    %68 = vector.shape_cast %67 : vector<8xf32> to vector<8x1xf32>
    %69 = tpu.reciprocal %68 {approx = true} : vector<8x1xf32> -> vector<8x1xf32>
    %70 = vector.broadcast %69 : vector<8x1xf32> to vector<8x8xf32>
    %71 = arith.mulf %66, %70 : vector<8x8xf32>
    %cst_24 = arith.constant dense<0.000000e+00> : vector<8x8xf32>
    %72 = tpu.matmul %71, %58, %cst_24 {dimension_numbers = #tpu.dot_dimension_numbers<[1], [0], [0], [1], [0, 0, 1, 1], [], []>} : vector<8x8xf32>, vector<8x8xf32>, vector<8x8xf32> -> vector<8x8xf32>
    %73 = vector.extract_strided_slice %9 {offsets = [16, 0], sizes = [8, 32], strides = [1, 1]} : vector<32x32xf32> to vector<8x32xf32>
    %cst_25 = arith.constant dense<0.000000e+00> : vector<8x32xf32>
    %74 = tpu.matmul %72, %73, %cst_25 {dimension_numbers = #tpu.dot_dimension_numbers<[1], [0], [0], [1], [0, 0, 1, 1], [], []>} : vector<8x8xf32>, vector<8x32xf32>, vector<8x32xf32> -> vector<8x32xf32>
    %75 = arith.addf %55, %74 : vector<8x32xf32>
    %76 = vector.extract_strided_slice %6 {offsets = [0, 24], sizes = [8, 8], strides = [1, 1]} : vector<8x32xf32> to vector<8x8xf32>
    %77 = vector.extract_strided_slice %7 {offsets = [0, 24], sizes = [8, 8], strides = [1, 1]} : vector<8x32xf32> to vector<8x8xf32>
    %78 = vector.extract_strided_slice %8 {offsets = [0, 24], sizes = [8, 8], strides = [1, 1]} : vector<8x32xf32> to vector<8x8xf32>
    %cst_26 = arith.constant dense<0.000000e+00> : vector<8x8xf32>
    %79 = tpu.matmul %76, %77, %cst_26 {dimension_numbers = #tpu.dot_dimension_numbers<[1], [1], [0], [0], [0, 0, 1, 0], [], []>} : vector<8x8xf32>, vector<8x8xf32>, vector<8x8xf32> -> vector<8x8xf32>
    %cst_27 = arith.constant -1.000000e+06 : f32
    %80 = vector.broadcast %cst_27 : f32 to vector<8x8xf32>
    %81 = arith.select %14, %79, %80 : vector<8x8xi1>, vector<8x8xf32>
    %cst_28 = arith.constant dense<0xFF800000> : vector<8xf32>
    %82 = vector.multi_reduction <maximumf>, %81, %cst_28 [1] : vector<8x8xf32> to vector<8xf32>
    %83 = vector.shape_cast %82 : vector<8xf32> to vector<8x1xf32>
    %84 = vector.broadcast %83 : vector<8x1xf32> to vector<8x8xf32>
    %85 = arith.subf %81, %84 : vector<8x8xf32>
    %86 = math.exp %85 : vector<8x8xf32>
    %cst_29 = arith.constant dense<0.000000e+00> : vector<8xf32>
    %87 = vector.multi_reduction <add>, %86, %cst_29 [1] : vector<8x8xf32> to vector<8xf32>
    %88 = vector.shape_cast %87 : vector<8xf32> to vector<8x1xf32>
    %89 = tpu.reciprocal %88 {approx = true} : vector<8x1xf32> -> vector<8x1xf32>
    %90 = vector.broadcast %89 : vector<8x1xf32> to vector<8x8xf32>
    %91 = arith.mulf %86, %90 : vector<8x8xf32>
    %cst_30 = arith.constant dense<0.000000e+00> : vector<8x8xf32>
    %92 = tpu.matmul %91, %78, %cst_30 {dimension_numbers = #tpu.dot_dimension_numbers<[1], [0], [0], [1], [0, 0, 1, 1], [], []>} : vector<8x8xf32>, vector<8x8xf32>, vector<8x8xf32> -> vector<8x8xf32>
    %93 = vector.extract_strided_slice %9 {offsets = [24, 0], sizes = [8, 32], strides = [1, 1]} : vector<32x32xf32> to vector<8x32xf32>
    %cst_31 = arith.constant dense<0.000000e+00> : vector<8x32xf32>
    %94 = tpu.matmul %92, %93, %cst_31 {dimension_numbers = #tpu.dot_dimension_numbers<[1], [0], [0], [1], [0, 0, 1, 1], [], []>} : vector<8x8xf32>, vector<8x32xf32>, vector<8x32xf32> -> vector<8x32xf32>
    %95 = arith.addf %75, %94 : vector<8x32xf32>
    %c0_32 = arith.constant 0 : index
    %c0_33 = arith.constant 0 : index
    %c0_34 = arith.constant 0 : index
    %96 = vector.load %arg5[%c0_32, %c0_33, %c0_34] : memref<1x8x32xf32, #tpu.memory_space<vmem>>, vector<1x8x32xf32>
    %97 = vector.shape_cast %96 : vector<1x8x32xf32> to vector<8x32xf32>
    %98 = vector.shape_cast %95 : vector<8x32xf32> to vector<1x8x32xf32>
    tpu.vector_store %arg5[%c0_32, %c0_33, %c0_34], %98 {strides = array<i32>} : memref<1x8x32xf32, #tpu.memory_space<vmem>>, vector<1x8x32xf32>,
    return
  }
  func.func @transform_0(%arg0: i32, %arg1: memref<2xi32, #tpu.memory_space<smem>>) -> (i32, i32, i32) {
    %c0_i32 = arith.constant 0 : i32
    %c0_i32_0 = arith.constant 0 : i32
    %c0_i32_1 = arith.constant 0 : i32
    return %arg0, %c0_i32, %c0_i32_0 : i32, i32, i32
  }
  func.func @transform_1(%arg0: i32, %arg1: memref<2xi32, #tpu.memory_space<smem>>) -> (i32, i32) {
    %c0_i32 = arith.constant 0 : i32
    %c0_i32_0 = arith.constant 0 : i32
    %c0_i32_1 = arith.constant 0 : i32
    return %c0_i32, %c0_i32_0 : i32, i32
  }
  func.func @transform_2(%arg0: i32, %arg1: memref<2xi32, #tpu.memory_space<smem>>) -> (i32, i32) {
    %c0_i32 = arith.constant 0 : i32
    %c0_i32_0 = arith.constant 0 : i32
    %c0_i32_1 = arith.constant 0 : i32
    return %c0_i32, %c0_i32_0 : i32, i32
  }
  func.func @transform_3(%arg0: i32, %arg1: memref<2xi32, #tpu.memory_space<smem>>) -> (i32, i32, i32) {
    %c0_i32 = arith.constant 0 : i32
    %c0_i32_0 = arith.constant 0 : i32
    %c0_i32_1 = arith.constant 0 : i32
    return %arg0, %c0_i32, %c0_i32_0 : i32, i32, i32
  }
}

</mosaic_0001>

<llo_original>
// kernel: tpu_custom_call.1
$region0: #{tpu_custom_call.1}
  #allocation0 [shape = 'u32[]', space=smem, size = 0x4, offset = 0x4, fixed_abs, tag = 'smem constant byte address 0x4 - core index']
  #allocation1 [shape = 'u32[72,128]{1,0:T(1,128)}', space=vmem, size = 0x9000, scoped, tag = 'internal scratch']
  #allocation2 [shape = 's32[1]{0}', space=sflag, size = 0x4, scoped, tag = 'scoped memory for tpu_custom_call.1']
  #allocation3 [shape = 'u8[512]{0}', space=smem, size = 0x200, scoped, tag = 'prefetched SMEM operand 0']
  %s0 = inlined_call_operand.hbm [shape: s32[2], index: 0, kind: input, shape index: {}]
  %s1 = inlined_call_operand.hbm [shape: f32[2,8,16], index: 1, kind: input, shape index: {}]
  %s2 = inlined_call_operand.hbm [shape: f32[16,96], index: 2, kind: input, shape index: {}]
  %s3 = inlined_call_operand.hbm [shape: f32[32,32], index: 3, kind: input, shape index: {}]
  %s4 = inlined_call_operand.hbm [shape: f32[2,8,32], index: 4, kind: output, shape index: {}]
  %s5 = sld [smem:[#allocation0]]
  $region57: #{tpu_custom_call.1} parent=0
    _
  %s7 = ssub.s32 1, %s5
  %s8 = scalar_select 0, %s7, %s5
  %s10 = sshll.u32 %s0, 4
  %s11 = int_to_ptr.hbm [resolvable:$true] %s10
  %13 = dma.hbm_to_smem %s11, 16, [#allocation3], [#allocation2]
  %15 = dma.done [#allocation2], 16
  %16 = sfence
  $region1: #{tpu_custom_call.1} parent=0
    #allocation4 [shape = 'u8[8192]{0}', space=vmem, size = 0x2000, scoped, tag = 'input window, operand 1']
    #allocation5 [shape = 's32[2]{0}', space=sflag, size = 0x8, scoped, tag = 'scoped memory for tpu_custom_call.1']
    #allocation6 [shape = 's32[2]{0}', space=sflag, size = 0x8, scoped, tag = 'scoped memory for tpu_custom_call.1']
    #allocation7 [shape = 'u8[8192]{0}', space=vmem, size = 0x2000, scoped, tag = 'input window, operand 2, single buffered']
    #allocation8 [shape = 's32[1]{0}', space=sflag, size = 0x4, scoped, tag = 'scoped memory for tpu_custom_call.1']
    #allocation9 [shape = 'u8[16384]{0}', space=vmem, size = 0x4000, scoped, tag = 'input window, operand 3, single buffered']
    #allocation10 [shape = 'u8[8192]{0}', space=vmem, size = 0x2000, scoped, tag = 'output window, operand 0']
    %17 = vsyncpa [#allocation5], 0
    %s18 = scalar_lea.sflag [#allocation5], 1
    %19 = vsyncpa %s18, 0
    %20 = vsyncpa [#allocation8], 0
    %21 = vsyncpa [#allocation6], 0
    %s22 = scalar_lea.sflag [#allocation6], 1
    %23 = vsyncpa %s22, 0
    loop: start=0, step=1, limit=4
    $region2: #{tpu_custom_call.1} parent=1 // loop_pre_header
      _
    $region3: #{tpu_custom_call.1} parent=1 // loop_header
      %s25 = sphi 0, %s29
      %p26 = scmp.ge.s32.totalorder %s25, 4
      %s35 = sphi 0, %s37
      %s38 = sphi 0, %s35
      %s39 = sphi 0, %s38
      %s55 = sphi 0, %s39
      %s59 = sphi 0, %s59
      %s61 = sphi 0, %s59
      %s62 = sphi 0, %s61
      %s76 = sphi 0, %s62
      %s80 = sphi 0, %s80
      %s82 = sphi 0, %s80
      %s83 = sphi 0, %s82
      %s97 = sphi 0, %s83
      %s103 = sphi 0, %s105
      %s106 = sphi 0, %s103
      %s107 = sphi 0, %s106
      %s123 = sphi 0, %s107
    $region4: #{tpu_custom_call.1} parent=1 // loop_header_branch
      %28 = sbr.rel (%p26) target = $region8
    $region5: #{tpu_custom_call.1} parent=1 // loop_body
      %s30 = ssub.s32 %s25, 1
      %s31 = ssub.s32 %s25, 2
      %s32 = sadd.s32 %s25, 1
      %s33 = ssub.s32 %s25, %s32
      %p34 = scmp.eq.s32.totalorder %s33, 0
      %s36 = sadd.s32 %s35, 1
      %s37 = scalar_select %p34, %s35, %s36
      %p40 = pneg %p34
      %p41 = scmp.eq.s32.totalorder %s25, 1
      %p42 = por %p40, %p41
      %p43 = scmp.ne.s32.totalorder %s35, %s38
      %p44 = scmp.eq.s32.totalorder %s25, 0
      %p45 = por %p43, %p44
      %p46 = scmp.ne.s32.totalorder %s35, %s38
      %p47 = scmp.eq.s32.totalorder %s30, 1
      %p48 = por %p46, %p47
      %p49 = scmp.ne.s32.totalorder %s38, %s39
      %p50 = scmp.eq.s32.totalorder %s30, 0
      %p51 = por %p49, %p50
      %p52 = scmp.ne.s32.totalorder %s38, %s39
      %p53 = scmp.eq.s32.totalorder %s31, 1
      %p54 = por %p52, %p53
      %p56 = scmp.ne.s32.totalorder %s39, %s55
      %p57 = scmp.eq.s32.totalorder %s31, 0
      %p58 = por %p56, %p57
      %s60 = sadd.s32 %s59, 1
      %p63 = scmp.eq.s32.totalorder %s25, 1
      %p64 = scmp.ne.s32.totalorder %s59, %s61
      %p65 = scmp.eq.s32.totalorder %s25, 0
      %p66 = por %p64, %p65
      %p67 = scmp.ne.s32.totalorder %s59, %s61
      %p68 = scmp.eq.s32.totalorder %s30, 1
      %p69 = por %p67, %p68
      %p70 = scmp.ne.s32.totalorder %s61, %s62
      %p71 = scmp.eq.s32.totalorder %s30, 0
      %p72 = por %p70, %p71
      %p73 = scmp.ne.s32.totalorder %s61, %s62
      %p74 = scmp.eq.s32.totalorder %s31, 1
      %p75 = por %p73, %p74
      %p77 = scmp.ne.s32.totalorder %s62, %s76
      %p78 = scmp.eq.s32.totalorder %s31, 0
      %p79 = por %p77, %p78
      %s81 = sadd.s32 %s80, 1
      %p84 = scmp.eq.s32.totalorder %s25, 1
      %p85 = scmp.ne.s32.totalorder %s80, %s82
      %p86 = scmp.eq.s32.totalorder %s25, 0
      %p87 = por %p85, %p86
      %p88 = scmp.ne.s32.totalorder %s80, %s82
      %p89 = scmp.eq.s32.totalorder %s30, 1
      %p90 = por %p88, %p89
      %p91 = scmp.ne.s32.totalorder %s82, %s83
      %p92 = scmp.eq.s32.totalorder %s30, 0
      %p93 = por %p91, %p92
      %p94 = scmp.ne.s32.totalorder %s82, %s83
      %p95 = scmp.eq.s32.totalorder %s31, 1
      %p96 = por %p94, %p95
      %p98 = scmp.ne.s32.totalorder %s83, %s97
      %p99 = scmp.eq.s32.totalorder %s31, 0
      %p100 = por %p98, %p99
      %s101 = ssub.s32 %s25, %s32
      %p102 = scmp.eq.s32.totalorder %s101, 0
      %s104 = sadd.s32 %s103, 1
      %s105 = scalar_select %p102, %s103, %s104
      %p108 = pneg %p102
      %p109 = scmp.eq.s32.totalorder %s25, 1
      %p110 = por %p108, %p109
      %p111 = scmp.ne.s32.totalorder %s103, %s106
      %p112 = scmp.eq.s32.totalorder %s25, 0
      %p113 = por %p111, %p112
      %p114 = scmp.ne.s32.totalorder %s103, %s106
      %p115 = scmp.eq.s32.totalorder %s30, 1
      %p116 = por %p114, %p115
      %p117 = scmp.ne.s32.totalorder %s106, %s107
      %p118 = scmp.eq.s32.totalorder %s30, 0
      %p119 = por %p117, %p118
      %p120 = scmp.ne.s32.totalorder %s106, %s107
      %p121 = scmp.eq.s32.totalorder %s31, 1
      %p122 = por %p120, %p121
      %p124 = scmp.ne.s32.totalorder %s107, %s123
      %p125 = scmp.eq.s32.totalorder %s31, 0
      %p126 = por %p124, %p125
      %p127 = scmp.le.s32.totalorder 1, %s25
      %p128 = scmp.lt.s32.totalorder %s25, 3
      %p129 = pnand %p127, %p128
      %p130 = pneg %p129
      // Predicated region
      $region9: #{tpu_custom_call.1} parent=5 // pred_check
        _
      $region10: #{tpu_custom_call.1} parent=5 // pred_check_branch
        %132 = sbr.rel (%p129) target = $region12
      $region11: #{tpu_custom_call.1} parent=5 // pred_region
        %s133 = ssub.s32 %s25, 1
        // Predicated region
        $region13: #{tpu_custom_call.1} parent=11 // pred_check
          %p134 = pneg %p72
        $region14: #{tpu_custom_call.1} parent=11 // pred_check_branch
          %136 = sbr.rel (%p134) target = $region16
        $region15: #{tpu_custom_call.1} parent=11 // pred_region
          %138 = vsyncadd [#allocation8], 0
          %s139 = sshll.u32 %s2, 4
          %s140 = int_to_ptr.hbm [resolvable:$true] %s139
          %s141 = sshll.u32 [#allocation7], 4
          %s142 = int_to_ptr.vmem [resolvable:$true] %s141
          %147 = dma.hbm_to_vmem [thread:$0]  %s140, 256, %s142, [#allocation8], 128, 128, 8
        $region16: #{tpu_custom_call.1} parent=11 // pred_fallthru
          _
        // Predicated region
        $region17: #{tpu_custom_call.1} parent=11 // pred_check
          %p148 = pneg %p93
        $region18: #{tpu_custom_call.1} parent=11 // pred_check_branch
          %150 = sbr.rel (%p148) target = $region20
        $region19: #{tpu_custom_call.1} parent=11 // pred_region
          %152 = vsyncadd [#allocation8], 0
          %s153 = sshll.u32 %s3, 4
          %s154 = int_to_ptr.hbm [resolvable:$true] %s153
          %s155 = sshll.u32 [#allocation9], 4
          %s156 = int_to_ptr.vmem [resolvable:$true] %s155
          %161 = dma.hbm_to_vmem [thread:$0]  %s154, 512, %s156, [#allocation8], 128, 128, 8
        $region20: #{tpu_custom_call.1} parent=11 // pred_fallthru
          _
      $region12: #{tpu_custom_call.1} parent=5 // pred_fallthru
        _
      %p162 = scmp.lt.s32.totalorder %s25, 2
      // Predicated region
      $region21: #{tpu_custom_call.1} parent=5 // pred_check
        %p163 = pneg %p162
      $region22: #{tpu_custom_call.1} parent=5 // pred_check_branch
        %165 = sbr.rel (%p163) target = $region24
      $region23: #{tpu_custom_call.1} parent=5 // pred_region
        // Predicated region
        $region25: #{tpu_custom_call.1} parent=23 // pred_check
          %p166 = pneg %p45
        $region26: #{tpu_custom_call.1} parent=23 // pred_check_branch
          %168 = sbr.rel (%p166) target = $region28
        $region27: #{tpu_custom_call.1} parent=23 // pred_region
          %s169 = sand.u32 %s35, 1
          %s170 = scalar_lea.sflag [#allocation5], %s169
          %s171 = sand.u32 %s35, 1
          %s172 = smul.addr %s171, 8
          %s173 = scalar_lea.vmem [#allocation4], %s172
          %175 = vsyncadd %s170, 0
          %s176 = smul.addr %s25, 8
          %s177 = scalar_lea.hbm %s1, %s176
          %s179 = sshll.u32 %s177, 4
          %s180 = int_to_ptr.hbm [resolvable:$true] %s179
          %s181 = sshll.u32 %s173, 4
          %s182 = int_to_ptr.vmem [resolvable:$true] %s181
          %184 = dma.hbm_to_vmem [thread:$0]  %s180, 128, %s182, %s170
        $region28: #{tpu_custom_call.1} parent=23 // pred_fallthru
          _
      $region24: #{tpu_custom_call.1} parent=5 // pred_fallthru
        _
      %p185 = scmp.le.s32.totalorder 1, %s25
      %p186 = scmp.lt.s32.totalorder %s25, 3
      %p187 = pnand %p185, %p186
      %p188 = pneg %p187
      // Predicated region
      $region29: #{tpu_custom_call.1} parent=5 // pred_check
        _
      $region30: #{tpu_custom_call.1} parent=5 // pred_check_branch
        %190 = sbr.rel (%p187) target = $region32
      $region31: #{tpu_custom_call.1} parent=5 // pred_region
        %s191 = ssub.s32 %s25, 1
        %s192 = sand.u32 %s38, 1
        %s193 = scalar_lea.sflag [#allocation5], %s192
        %s194 = sand.u32 %s38, 1
        %s195 = smul.addr %s194, 8
        %s196 = scalar_lea.vmem [#allocation4], %s195
        // Predicated region
        $region33: #{tpu_custom_call.1} parent=31 // pred_check
          %p197 = pneg %p51
        $region34: #{tpu_custom_call.1} parent=31 // pred_check_branch
          %199 = sbr.rel (%p197) target = $region36
        $region35: #{tpu_custom_call.1} parent=31 // pred_region
          %201 = dma.done %s193, 128
        $region36: #{tpu_custom_call.1} parent=31 // pred_fallthru
          _
        // Predicated region
        $region37: #{tpu_custom_call.1} parent=31 // pred_check
          %p202 = pneg %p72
        $region38: #{tpu_custom_call.1} parent=31 // pred_check_branch
          %204 = sbr.rel (%p202) target = $region40
        $region39: #{tpu_custom_call.1} parent=31 // pred_region
          %206 = dma.done [#allocation8], 256
        $region40: #{tpu_custom_call.1} parent=31 // pred_fallthru
          _
        // Predicated region
        $region41: #{tpu_custom_call.1} parent=31 // pred_check
          %p207 = pneg %p93
        $region42: #{tpu_custom_call.1} parent=31 // pred_check_branch
          %209 = sbr.rel (%p207) target = $region44
        $region43: #{tpu_custom_call.1} parent=31 // pred_region
          %211 = dma.done [#allocation8], 512
        $region44: #{tpu_custom_call.1} parent=31 // pred_fallthru
          _
        %s212 = sand.u32 %s38, 1
        %s213 = scalar_lea.sflag [#allocation5], %s212
        %s214 = sand.u32 %s38, 1
        %s215 = smul.addr %s214, 8
        %s216 = scalar_lea.vmem [#allocation4], %s215
        %p217 = pneg %p51
        %p218 = pneg %p48
        %p219 = pneg %p72
        %p220 = pneg %p69
        %p221 = pneg %p93
        %p222 = pneg %p90
        %p223 = pneg %p119
        %p224 = pneg %p116
        %s225 = sand.u32 %s106, 1
        %s226 = scalar_lea.sflag [#allocation6], %s225
        %s227 = sand.u32 %s106, 1
        %s228 = smul.addr %s227, 8
        %s229 = scalar_lea.vmem [#allocation10], %s228
        %v230 = vld [vmem:[%s196] sm:$0xff]
        %v231 = vld [vmem:[#allocation7] sm:$0xff]
        %v232 = vld [vmem:[#allocation7 + $0x8] sm:$0xff]
        %vm233 = vcmask 130048
        %v235 = vsel %vm233, %v230, 0
        %237 = vmatpush.msra.mxu0 0.0
        %238 = vmatpush.msra.mxu0 0.0
        %239 = vmatpush.msra.mxu0 0.0
        %240 = vmatpush.msra.mxu0 0.0
        %241 = vmatpush.msra.mxu0 0.0
        %242 = vmatpush.msra.mxu0 0.0
        %243 = vmatpush.msra.mxu0 0.0
        %244 = vmatpush.msra.mxu0 0.0
        %245 = vmatpush.msra.mxu0 0.0
        %246 = vmatpush.msra.mxu0 0.0
        %247 = vmatpush.msra.mxu0 0.0
        %248 = vmatpush.msra.mxu0 0.0
        %249 = vmatpush.msra.mxu0 0.0
        %250 = vmatpush.msra.mxu0 0.0
        %251 = vmatpush.msra.mxu0 %v232
        %252 = vmatpush.msra.mxu0 %v231
        %253 = vmatmul.f32.gmra.mxu0 %v235
        %v254 = vpop.f32.mrf.mxu0
        %v255 = vadd.f32 0.0, %v254
        %256 = vdwg.mxu0
        %v257 = vmul.f32 %v255, 0.35355338
        %v258 = vld [vmem:[#allocation9] sm:$0xff]
        %v259 = vld [vmem:[#allocation9 + $0x8] sm:$0xff]
        %v260 = vld [vmem:[#allocation9 + $0x10] sm:$0xff]
        %v261 = vld [vmem:[#allocation9 + $0x18] sm:$0xff]
        %s262 = sld [smem:[#allocation3 + %s30]]
        %v263 = vlaneseq
        %v264 = vand.u32 %v263, 127
        %v265 = vstv %s262
        %vm266 = vcmp.lt.s32.totalorder %v264, %v265
        %268 = vrot.lane.b32.xlu0 %v255, 96
        %v269 = vpop.permute.xlu0 %268
        %vm270 = vcmask 64512
        %v272 = vsel %vm270, %v257, 0
        %v274 = vsel %vm270, %v269, 0
        %276 = vmatpush.xpose.msra.mxu0 0.0
        %277 = vmatpush.xpose.msra.mxu0 0.0
        %278 = vmatpush.xpose.msra.mxu0 0.0
        %279 = vmatpush.xpose.msra.mxu0 0.0
        %280 = vmatpush.xpose.msra.mxu0 0.0
        %281 = vmatpush.xpose.msra.mxu0 0.0
        %282 = vmatpush.xpose.msra.mxu0 0.0
        %283 = vmatpush.xpose.msra.mxu0 0.0
        %284 = vmatpush.xpose.msra.mxu0 0.0
        %285 = vmatpush.xpose.msra.mxu0 0.0
        %286 = vmatpush.xpose.msra.mxu0 0.0
        %287 = vmatpush.xpose.msra.mxu0 0.0
        %288 = vmatpush.xpose.msra.mxu0 0.0
        %289 = vmatpush.xpose.msra.mxu0 0.0
        %290 = vmatpush.xpose.msra.mxu0 0.0
        %291 = vmatpush.xpose.msra.mxu0 %v274
        %292 = vmatmul.f32.gmra.mxu0 %v272
        %v293 = vpop.f32.mrf.mxu0
        %v294 = vadd.f32 0.0, %v293
        %295 = vdwg.mxu0
        %v296 = vsel %vm266, %v294, -1000000.0
        %v297 = vsel %vm270, %v296, -inf
        %298 = vmax.xlane.f32.xlu0 %v297
        %v299 = vpop.xlane.xlu0 %298
        %v300 = vsub.f32 %v296, %v299
        %v301 = vmul.f32 %v300, 1.442695
        %v302 = vpow.pop %v301
        %v303 = vsel %vm270, %v302, 0.0
        %304 = vadd.xlane.f32.xlu0 %v303
        %v305 = vpop.xlane.xlu0 %304
        %v306 = vrcp.pop %v305
        %v307 = vmul.f32 %v302, %v306
        %308 = vrot.lane.b32.xlu0 %v255, 64
        %v309 = vpop.permute.xlu0 %308
        %v312 = vsel %vm270, %v307, 0
        %314 = vmatpush.msra.mxu0 0.0
        %315 = vmatpush.msra.mxu0 0.0
        %316 = vmatpush.msra.mxu0 0.0
        %317 = vmatpush.msra.mxu0 0.0
        %318 = vmatpush.msra.mxu0 0.0
        %319 = vmatpush.msra.mxu0 0.0
        %320 = vmatpush.msra.mxu0 0.0
        %321 = vmatpush.msra.mxu0 0.0
        %322 = vmatpush.msra.mxu0 0.0
        %323 = vmatpush.msra.mxu0 0.0
        %324 = vmatpush.msra.mxu0 0.0
        %325 = vmatpush.msra.mxu0 0.0
        %326 = vmatpush.msra.mxu0 0.0
        %327 = vmatpush.msra.mxu0 0.0
        %328 = vmatpush.msra.mxu0 0.0
        %329 = vmatpush.msra.mxu0 %v309
        %330 = vmatmul.f32.gmra.mxu0 %v312
        %v331 = vpop.f32.mrf.mxu0
        %v332 = vadd.f32 0.0, %v331
        %333 = vdwg.mxu0
        %334 = vrot.lane.b32.xlu0 %v257, 120
        %v335 = vpop.permute.xlu0 %334
        %336 = vrot.lane.b32.xlu0 %v255, 88
        %v337 = vpop.permute.xlu0 %336
        %v338 = vsel %vm270, %v335, 0
        %v340 = vsel %vm270, %v337, 0
        %342 = vmatpush.xpose.msra.mxu0 0.0
        %343 = vmatpush.xpose.msra.mxu0 0.0
        %344 = vmatpush.xpose.msra.mxu0 0.0
        %345 = vmatpush.xpose.msra.mxu0 0.0
        %346 = vmatpush.xpose.msra.mxu0 0.0
        %347 = vmatpush.xpose.msra.mxu0 0.0
        %348 = vmatpush.xpose.msra.mxu0 0.0
        %349 = vmatpush.xpose.msra.mxu0 0.0
        %350 = vmatpush.xpose.msra.mxu0 0.0
        %351 = vmatpush.xpose.msra.mxu0 0.0
        %352 = vmatpush.xpose.msra.mxu0 0.0
        %353 = vmatpush.xpose.msra.mxu0 0.0
        %354 = vmatpush.xpose.msra.mxu0 0.0
        %355 = vmatpush.xpose.msra.mxu0 0.0
        %356 = vmatpush.xpose.msra.mxu0 0.0
        %357 = vmatpush.xpose.msra.mxu0 %v340
        %358 = vmatmul.f32.gmra.mxu0 %v338
        %v359 = vpop.f32.mrf.mxu0
        %v360 = vadd.f32 0.0, %v359
        %361 = vdwg.mxu0
        %v362 = vsel %vm266, %v360, -1000000.0
        %v363 = vsel %vm270, %v362, -inf
        %364 = vmax.xlane.f32.xlu0 %v363
        %v365 = vpop.xlane.xlu0 %364
        %v366 = vsub.f32 %v362, %v365
        %v367 = vmul.f32 %v366, 1.442695
        %v368 = vpow.pop %v367
        %v369 = vsel %vm270, %v368, 0.0
        %370 = vadd.xlane.f32.xlu0 %v369
        %v371 = vpop.xlane.xlu0 %370
        %v372 = vrcp.pop %v371
        %v373 = vmul.f32 %v368, %v372
        %374 = vrot.lane.b32.xlu0 %v255, 56
        %v375 = vpop.permute.xlu0 %374
        %v378 = vsel %vm270, %v373, 0
        %380 = vmatpush.msra.mxu0 0.0
        %381 = vmatpush.msra.mxu0 0.0
        %382 = vmatpush.msra.mxu0 0.0
        %383 = vmatpush.msra.mxu0 0.0
        %384 = vmatpush.msra.mxu0 0.0
        %385 = vmatpush.msra.mxu0 0.0
        %386 = vmatpush.msra.mxu0 0.0
        %387 = vmatpush.msra.mxu0 0.0
        %388 = vmatpush.msra.mxu0 0.0
        %389 = vmatpush.msra.mxu0 0.0
        %390 = vmatpush.msra.mxu0 0.0
        %391 = vmatpush.msra.mxu0 0.0
        %392 = vmatpush.msra.mxu0 0.0
        %393 = vmatpush.msra.mxu0 0.0
        %394 = vmatpush.msra.mxu0 0.0
        %395 = vmatpush.msra.mxu0 %v375
        %396 = vmatmul.f32.gmra.mxu0 %v378
        %v397 = vpop.f32.mrf.mxu0
        %v398 = vadd.f32 0.0, %v397
        %399 = vdwg.mxu0
        %v401 = vsel %vm270, %v398, 0
        %403 = vmatpush.msra.mxu0 0.0
        %404 = vmatpush.msra.mxu0 0.0
        %405 = vmatpush.msra.mxu0 0.0
        %406 = vmatpush.msra.mxu0 0.0
        %407 = vmatpush.msra.mxu0 0.0
        %408 = vmatpush.msra.mxu0 0.0
        %409 = vmatpush.msra.mxu0 0.0
        %410 = vmatpush.msra.mxu0 0.0
        %411 = vmatpush.msra.mxu0 0.0
        %412 = vmatpush.msra.mxu0 0.0
        %413 = vmatpush.msra.mxu0 0.0
        %414 = vmatpush.msra.mxu0 0.0
        %415 = vmatpush.msra.mxu0 0.0
        %416 = vmatpush.msra.mxu0 0.0
        %417 = vmatpush.msra.mxu0 0.0
        %418 = vmatpush.msra.mxu0 %v259
        %419 = vmatmul.f32.gmra.mxu0 %v401
        %v420 = vpop.f32.mrf.mxu0
        %v421 = vadd.f32 0.0, %v420
        %422 = vdwg.mxu0
        %v424 = vsel %vm270, %v332, 0
        %426 = vmatpush.msra.mxu0 0.0
        %427 = vmatpush.msra.mxu0 0.0
        %428 = vmatpush.msra.mxu0 0.0
        %429 = vmatpush.msra.mxu0 0.0
        %430 = vmatpush.msra.mxu0 0.0
        %431 = vmatpush.msra.mxu0 0.0
        %432 = vmatpush.msra.mxu0 0.0
        %433 = vmatpush.msra.mxu0 0.0
        %434 = vmatpush.msra.mxu0 0.0
        %435 = vmatpush.msra.mxu0 0.0
        %436 = vmatpush.msra.mxu0 0.0
        %437 = vmatpush.msra.mxu0 0.0
        %438 = vmatpush.msra.mxu0 0.0
        %439 = vmatpush.msra.mxu0 0.0
        %440 = vmatpush.msra.mxu0 0.0
        %441 = vmatpush.msra.mxu0 %v258
        %442 = vmatmul.f32.gmra.mxu0 %v424
        %v443 = vpop.f32.mrf.mxu0
        %v444 = vadd.f32 %v421, %v443
        %445 = vdwg.mxu0
        %446 = vrot.lane.b32.xlu0 %v257, 112
        %v447 = vpop.permute.xlu0 %446
        %448 = vrot.lane.b32.xlu0 %v255, 80
        %v449 = vpop.permute.xlu0 %448
        %v450 = vsel %vm270, %v447, 0
        %v452 = vsel %vm270, %v449, 0
        %454 = vmatpush.xpose.msra.mxu0 0.0
        %455 = vmatpush.xpose.msra.mxu0 0.0
        %456 = vmatpush.xpose.msra.mxu0 0.0
        %457 = vmatpush.xpose.msra.mxu0 0.0
        %458 = vmatpush.xpose.msra.mxu0 0.0
        %459 = vmatpush.xpose.msra.mxu0 0.0
        %460 = vmatpush.xpose.msra.mxu0 0.0
        %461 = vmatpush.xpose.msra.mxu0 0.0
        %462 = vmatpush.xpose.msra.mxu0 0.0
        %463 = vmatpush.xpose.msra.mxu0 0.0
        %464 = vmatpush.xpose.msra.mxu0 0.0
        %465 = vmatpush.xpose.msra.mxu0 0.0
        %466 = vmatpush.xpose.msra.mxu0 0.0
        %467 = vmatpush.xpose.msra.mxu0 0.0
        %468 = vmatpush.xpose.msra.mxu0 0.0
        %469 = vmatpush.xpose.msra.mxu0 %v452
        %470 = vmatmul.f32.gmra.mxu0 %v450
        %v471 = vpop.f32.mrf.mxu0
        %v472 = vadd.f32 0.0, %v471
        %473 = vdwg.mxu0
        %v474 = vsel %vm266, %v472, -1000000.0
        %v475 = vsel %vm270, %v474, -inf
        %476 = vmax.xlane.f32.xlu0 %v475
        %v477 = vpop.xlane.xlu0 %476
        %v478 = vsub.f32 %v474, %v477
        %v479 = vmul.f32 %v478, 1.442695
        %v480 = vpow.pop %v479
        %v481 = vsel %vm270, %v480, 0.0
        %482 = vadd.xlane.f32.xlu0 %v481
        %v483 = vpop.xlane.xlu0 %482
        %v484 = vrcp.pop %v483
        %v485 = vmul.f32 %v480, %v484
        %486 = vrot.lane.b32.xlu0 %v255, 48
        %v487 = vpop.permute.xlu0 %486
        %v490 = vsel %vm270, %v485, 0
        %492 = vmatpush.msra.mxu0 0.0
        %493 = vmatpush.msra.mxu0 0.0
        %494 = vmatpush.msra.mxu0 0.0
        %495 = vmatpush.msra.mxu0 0.0
        %496 = vmatpush.msra.mxu0 0.0
        %497 = vmatpush.msra.mxu0 0.0
        %498 = vmatpush.msra.mxu0 0.0
        %499 = vmatpush.msra.mxu0 0.0
        %500 = vmatpush.msra.mxu0 0.0
        %501 = vmatpush.msra.mxu0 0.0
        %502 = vmatpush.msra.mxu0 0.0
        %503 = vmatpush.msra.mxu0 0.0
        %504 = vmatpush.msra.mxu0 0.0
        %505 = vmatpush.msra.mxu0 0.0
        %506 = vmatpush.msra.mxu0 0.0
        %507 = vmatpush.msra.mxu0 %v487
        %508 = vmatmul.f32.gmra.mxu0 %v490
        %v509 = vpop.f32.mrf.mxu0
        %v510 = vadd.f32 0.0, %v509
        %511 = vdwg.mxu0
        %v513 = vsel %vm270, %v510, 0
        %515 = vmatpush.msra.mxu0 0.0
        %516 = vmatpush.msra.mxu0 0.0
        %517 = vmatpush.msra.mxu0 0.0
        %518 = vmatpush.msra.mxu0 0.0
        %519 = vmatpush.msra.mxu0 0.0
        %520 = vmatpush.msra.mxu0 0.0
        %521 = vmatpush.msra.mxu0 0.0
        %522 = vmatpush.msra.mxu0 0.0
        %523 = vmatpush.msra.mxu0 0.0
        %524 = vmatpush.msra.mxu0 0.0
        %525 = vmatpush.msra.mxu0 0.0
        %526 = vmatpush.msra.mxu0 0.0
        %527 = vmatpush.msra.mxu0 0.0
        %528 = vmatpush.msra.mxu0 0.0
        %529 = vmatpush.msra.mxu0 0.0
        %530 = vmatpush.msra.mxu0 %v260
        %531 = vmatmul.f32.gmra.mxu0 %v513
        %v532 = vpop.f32.mrf.mxu0
        %v533 = vadd.f32 0.0, %v532
        %534 = vdwg.mxu0
        %v535 = vadd.f32 %v444, %v533
        %536 = vrot.lane.b32.xlu0 %v257, 104
        %v537 = vpop.permute.xlu0 %536
        %538 = vrot.lane.b32.xlu0 %v255, 72
        %v539 = vpop.permute.xlu0 %538
        %v540 = vsel %vm270, %v537, 0
        %v542 = vsel %vm270, %v539, 0
        %544 = vmatpush.xpose.msra.mxu0 0.0
        %545 = vmatpush.xpose.msra.mxu0 0.0
        %546 = vmatpush.xpose.msra.mxu0 0.0
        %547 = vmatpush.xpose.msra.mxu0 0.0
        %548 = vmatpush.xpose.msra.mxu0 0.0
        %549 = vmatpush.xpose.msra.mxu0 0.0
        %550 = vmatpush.xpose.msra.mxu0 0.0
        %551 = vmatpush.xpose.msra.mxu0 0.0
        %552 = vmatpush.xpose.msra.mxu0 0.0
        %553 = vmatpush.xpose.msra.mxu0 0.0
        %554 = vmatpush.xpose.msra.mxu0 0.0
        %555 = vmatpush.xpose.msra.mxu0 0.0
        %556 = vmatpush.xpose.msra.mxu0 0.0
        %557 = vmatpush.xpose.msra.mxu0 0.0
        %558 = vmatpush.xpose.msra.mxu0 0.0
        %559 = vmatpush.xpose.msra.mxu0 %v542
        %560 = vmatmul.f32.gmra.mxu0 %v540
        %v561 = vpop.f32.mrf.mxu0
        %v562 = vadd.f32 0.0, %v561
        %563 = vdwg.mxu0
        %v564 = vsel %vm266, %v562, -1000000.0
        %v565 = vsel %vm270, %v564, -inf
        %566 = vmax.xlane.f32.xlu0 %v565
        %v567 = vpop.xlane.xlu0 %566
        %v568 = vsub.f32 %v564, %v567
        %v569 = vmul.f32 %v568, 1.442695
        %v570 = vpow.pop %v569
        %v571 = vsel %vm270, %v570, 0.0
        %572 = vadd.xlane.f32.xlu0 %v571
        %v573 = vpop.xlane.xlu0 %572
        %v574 = vrcp.pop %v573
        %v575 = vmul.f32 %v570, %v574
        %576 = vrot.lane.b32.xlu0 %v255, 40
        %v577 = vpop.permute.xlu0 %576
        %v580 = vsel %vm270, %v575, 0
        %582 = vmatpush.msra.mxu0 0.0
        %583 = vmatpush.msra.mxu0 0.0
        %584 = vmatpush.msra.mxu0 0.0
        %585 = vmatpush.msra.mxu0 0.0
        %586 = vmatpush.msra.mxu0 0.0
        %587 = vmatpush.msra.mxu0 0.0
        %588 = vmatpush.msra.mxu0 0.0
        %589 = vmatpush.msra.mxu0 0.0
        %590 = vmatpush.msra.mxu0 0.0
        %591 = vmatpush.msra.mxu0 0.0
        %592 = vmatpush.msra.mxu0 0.0
        %593 = vmatpush.msra.mxu0 0.0
        %594 = vmatpush.msra.mxu0 0.0
        %595 = vmatpush.msra.mxu0 0.0
        %596 = vmatpush.msra.mxu0 0.0
        %597 = vmatpush.msra.mxu0 %v577
        %598 = vmatmul.f32.gmra.mxu0 %v580
        %v599 = vpop.f32.mrf.mxu0
        %v600 = vadd.f32 0.0, %v599
        %601 = vdwg.mxu0
        %v603 = vsel %vm270, %v600, 0
        %605 = vmatpush.msra.mxu0 0.0
        %606 = vmatpush.msra.mxu0 0.0
        %607 = vmatpush.msra.mxu0 0.0
        %608 = vmatpush.msra.mxu0 0.0
        %609 = vmatpush.msra.mxu0 0.0
        %610 = vmatpush.msra.mxu0 0.0
        %611 = vmatpush.msra.mxu0 0.0
        %612 = vmatpush.msra.mxu0 0.0
        %613 = vmatpush.msra.mxu0 0.0
        %614 = vmatpush.msra.mxu0 0.0
        %615 = vmatpush.msra.mxu0 0.0
        %616 = vmatpush.msra.mxu0 0.0
        %617 = vmatpush.msra.mxu0 0.0
        %618 = vmatpush.msra.mxu0 0.0
        %619 = vmatpush.msra.mxu0 0.0
        %620 = vmatpush.msra.mxu0 %v261
        %621 = vmatmul.f32.gmra.mxu0 %v603
        %v622 = vpop.f32.mrf.mxu0
        %v623 = vadd.f32 0.0, %v622
        %624 = vdwg.mxu0
        %v625 = vadd.f32 %v535, %v623
        %vm626 = vcmask 261120
        %627 = vst.msk [vmem:[%s229] sm:$0xff] %vm626, %v625
        %s628 = sand.u32 %s106, 1
        %s629 = scalar_lea.sflag [#allocation6], %s628
        %s630 = sand.u32 %s106, 1
        %s631 = smul.addr %s630, 8
        %s632 = scalar_lea.vmem [#allocation10], %s631
        // Predicated region
        $region45: #{tpu_custom_call.1} parent=31 // pred_check
          %p633 = pneg %p116
        $region46: #{tpu_custom_call.1} parent=31 // pred_check_branch
          %635 = sbr.rel (%p633) target = $region48
        $region47: #{tpu_custom_call.1} parent=31 // pred_region
          %637 = vsyncadd %s629, 0
          %s638 = smul.addr %s30, 8
          %s639 = scalar_lea.hbm %s4, %s638
          %s641 = sshll.u32 %s632, 4
          %s642 = int_to_ptr.vmem [resolvable:$true] %s641
          %s643 = sshll.u32 %s639, 4
          %s644 = int_to_ptr.hbm [resolvable:$true] %s643
          %646 = dma.vmem_to_hbm [thread:$0]  %s642, 128, %s644, %s629
        $region48: #{tpu_custom_call.1} parent=31 // pred_fallthru
          _
      $region32: #{tpu_custom_call.1} parent=5 // pred_fallthru
        _
      %p647 = scmp.le.s32.totalorder 2, %s25
      // Predicated region
      $region49: #{tpu_custom_call.1} parent=5 // pred_check
        %p648 = pneg %p647
      $region50: #{tpu_custom_call.1} parent=5 // pred_check_branch
        %650 = sbr.rel (%p648) target = $region52
      $region51: #{tpu_custom_call.1} parent=5 // pred_region
        %s651 = ssub.s32 %s25, 2
        // Predicated region
        $region53: #{tpu_custom_call.1} parent=51 // pred_check
          %p652 = pneg %p122
        $region54: #{tpu_custom_call.1} parent=51 // pred_check_branch
          %654 = sbr.rel (%p652) target = $region56
        $region55: #{tpu_custom_call.1} parent=51 // pred_region
          %s655 = sand.u32 %s107, 1
          %s656 = scalar_lea.sflag [#allocation6], %s655
          %s657 = sand.u32 %s107, 1
          %s658 = smul.addr %s657, 8
          %s659 = scalar_lea.vmem [#allocation10], %s658
          %661 = dma.done %s656, 128
        $region56: #{tpu_custom_call.1} parent=51 // pred_fallthru
          _
      $region52: #{tpu_custom_call.1} parent=5 // pred_fallthru
        _
    $region6: #{tpu_custom_call.1} parent=1 // loop_footer
      %s29 = sadd.s32 1, %s25
    $region7: #{tpu_custom_call.1} parent=1 // loop_footer_branch
      %24 = sbr.rel target = $region3
    $region8: #{tpu_custom_call.1} parent=1 // loop_exit
      _
    %662 = vsyncpa [#allocation5], 1
    %s663 = scalar_lea.sflag [#allocation5], 1
    %664 = vsyncpa %s663, 1
    %665 = vsyncpa [#allocation8], 1
    %666 = vsyncpa [#allocation6], 1
    %s667 = scalar_lea.sflag [#allocation6], 1
    %668 = vsyncpa %s667, 1

</llo_original>
